<compile_context>
chip_gen: v7x
topology: tpu7x:2x2x1
jax: 0.10.0
libtpu: 0.0.40
codegen_flags: <defaults>
</compile_context>

<pallas_src>
import math
import functools

import jax
import jax.numpy as jnp
from jax import lax
from jax.experimental import pallas as pl
from jax.experimental.pallas import tpu as pltpu

EPS = 1e-5      # torch.nn.BatchNorm1d default eps
N_VIEWS = 2     # y1 / y2


# ---------------------------------------------------------------------------
# generation-aware config
# ---------------------------------------------------------------------------
def _pick_config():
    """Tile sizes / buffering / scoped-VMEM limit per TPU generation.

    Per-call VMEM (bf16 streams, f32 acc):
      2*tm*tk + wbuf*tk*tf + 2*tm*tf  (bf16)  +  tm*tf*4 (f32 accumulator)
    """
    vmem_cap = None
    try:
        vmem_cap = pltpu.get_tpu_info().vmem_capacity_bytes
    except Exception:
        vmem_cap = None
    if vmem_cap is not None and vmem_cap <= 64 * 1024 * 1024:
        # v7x-class: 64 MiB VMEM, 3.2 TB/s HBM -> smaller panels, deeper
        # weight buffering (~20 MiB footprint at these tiles).
        return dict(tile_m=512, tile_k=2048, tile_f=1024, loss_tile=1024,
                    w_buffers=3, vmem_limit=48 * 1024 * 1024)
    if vmem_cap is None:
        # Unknown generation: conservative tiles, standard double buffering.
        return dict(tile_m=512, tile_k=1024, tile_f=1024, loss_tile=1024,
                    w_buffers=2, vmem_limit=48 * 1024 * 1024)
    # v5e / v6e: 128 MiB VMEM (~40 MiB footprint at these tiles).
    return dict(tile_m=1024, tile_k=2048, tile_f=2048, loss_tile=2048,
                w_buffers=2, vmem_limit=100 * 1024 * 1024)


def prepare_params(params, compute_dtype):
    """Cast weights to the compute dtype ONCE (hoisted out of the forward)."""
    wb, w1, g1, b1, w2, g2, b2, w3 = params
    cd = compute_dtype
    f32 = jnp.float32
    return (wb.astype(cd), w1.astype(cd), g1.astype(f32), b1.astype(f32),
            w2.astype(cd), g2.astype(f32), b2.astype(f32), w3.astype(cd))


# ---------------------------------------------------------------------------
# Stage 1: tiled matmul (+ optional per-view BN statistics) kernel
# ---------------------------------------------------------------------------
def _make_matmul_kernel(with_stats, n_per_view, tm):
    def kernel(*refs):
        if with_stats:
            x_ref, w_ref, h_ref, stats_ref, acc_ref = refs
        else:
            x_ref, w_ref, h_ref, acc_ref = refs
            stats_ref = None

        i = pl.program_id(1)           # row (M) tile
        k = pl.program_id(2)           # reduction tile (innermost)
        last_k = k == pl.num_programs(2) - 1

        prod = jnp.dot(x_ref[...], w_ref[...],
                       preferred_element_type=jnp.float32)

        @pl.when(k == 0)               # write directly; no zero-fill + add
        def _():
            acc_ref[...] = prod

        @pl.when(k != 0)
        def _():
            acc_ref[...] += prod

        @pl.when(last_k)
        def _():
            h = acc_ref[...]
            h_ref[...] = h.astype(h_ref.dtype)
            if with_stats:
                # Each row tile belongs to exactly one view (tm | n_per_view),
                # so BN statistics never mix the two stacked views.
                v = (i * tm) // n_per_view
                s = jnp.sum(h, axis=0, keepdims=True)        # (1, tf)
                sq = jnp.sum(h * h, axis=0, keepdims=True)   # (1, tf)
                sel = lax.broadcasted_iota(jnp.int32, (N_VIEWS, 1), 0) == v
                upd = jnp.concatenate([jnp.where(sel, s, 0.0),
                                       jnp.where(sel, sq, 0.0)], axis=0)

                @pl.when(i == 0)
                def _():
                    stats_ref[...] = upd

                @pl.when(i != 0)
                def _():
                    stats_ref[...] += upd

    return kernel


def _linear(x, w, *, with_stats, n_per_view, tile_m, tile_k, tile_f,
            w_buffers, vmem_limit, out_dtype):
    m, kdim = x.shape
    kdim2, fdim = w.shape
    assert kdim == kdim2

    tm = math.gcd(tile_m, n_per_view)
    assert tm % 8 == 0, "per-view batch / tile_m must be a multiple of 8"
    assert m % tm == 0
    tk = min(tile_k, kdim)
    tf = min(tile_f, fdim)
    assert kdim % tk == 0 and fdim % tf == 0, (kdim, tk, fdim, tf)

    grid = (fdim // tf, m // tm, kdim // tk)   # (j, i, k); reduction last

    w_kwargs = {}
    if w_buffers != 2:                          # v7x: deeper weight buffering
        w_kwargs["pipeline_mode"] = pl.Buffered(w_buffers)
    in_specs = [
        pl.BlockSpec((tm, tk), lambda j, i, k: (i, k)),            # activations
        pl.BlockSpec((tk, tf), lambda j, i, k: (k, j), **w_kwargs),  # weights
    ]

    out_shapes = [jax.ShapeDtypeStruct((m, fdim), out_dtype)]
    out_specs = [pl.BlockSpec((tm, tf), lambda j, i, k: (i, j))]
    if with_stats:
        # rows 0..1: per-view column sums, rows 2..3: per-view sums of squares
        out_shapes.append(jax.ShapeDtypeStruct((2 * N_VIEWS, fdim), jnp.float32))
        out_specs.append(pl.BlockSpec((2 * N_VIEWS, tf), lambda j, i, k: (0, j)))

    # stats accumulate across the i axis -> i must be "arbitrary" when used
    dims = ("parallel", "arbitrary" if with_stats else "parallel", "arbitrary")

    return pl.pallas_call(
        _make_matmul_kernel(with_stats, n_per_view, tm),
        out_shape=tuple(out_shapes) if with_stats else out_shapes[0],
        grid_spec=pltpu.PrefetchScalarGridSpec(
            num_scalar_prefetch=0,
            grid=grid,
            in_specs=in_specs,
            out_specs=tuple(out_specs) if with_stats else out_specs[0],
            scratch_shapes=[pltpu.VMEM((tm, tf), jnp.float32)],
        ),
        compiler_params=pltpu.CompilerParams(
            dimension_semantics=dims,
            vmem_limit_bytes=vmem_limit,
        ),
    )(x, w)


# ---------------------------------------------------------------------------
# Stage 2: per-view BatchNorm1d (+affine) (+ReLU) normalize kernel
# ---------------------------------------------------------------------------
def _make_norm_kernel(n_per_view, tm, affine, relu, view_scales):
    inv_n = 1.0 / float(n_per_view)

    def kernel(*refs):
        if affine:
            h_ref, stats_ref, g_ref, b_ref, o_ref = refs
        else:
            h_ref, stats_ref, o_ref = refs
            g_ref = b_ref = None

        i = pl.program_id(0)
        is_v0 = ((i * tm) // n_per_view) == 0

        h = h_ref[...].astype(jnp.float32)
        mean = jnp.where(is_v0, stats_ref[0:1, :], stats_ref[1:2, :]) * inv_n
        ex2 = jnp.where(is_v0, stats_ref[2:3, :], stats_ref[3:4, :]) * inv_n
        var = jnp.maximum(ex2 - mean * mean, 0.0)   # single-pass, clamped
        hn = (h - mean) * lax.rsqrt(var + EPS)
        if affine:
            hn = hn * g_ref[...] + b_ref[...]
        if view_scales is not None:
            # fold 1/batch_size of c into the z1 (first-view) rows
            hn = hn * jnp.where(is_v0, view_scales[0], view_scales[1])
        if relu:
            hn = jnp.maximum(hn, 0.0)
        o_ref[...] = hn.astype(o_ref.dtype)

    return kernel


def _bn_relu(h, stats, gamma, beta, *, n_per_view, tile_m, tile_f, relu,
             view_scales, vmem_limit, out_dtype):
    m, fdim = h.shape
    tm = math.gcd(tile_m, n_per_view)
    tf = min(tile_f, fdim)
    assert fdim % tf == 0 and m % tm == 0
    grid = (m // tm, fdim // tf)

    affine = gamma is not None
    in_specs = [
        pl.BlockSpec((tm, tf), lambda i, j: (i, j)),
        pl.BlockSpec((2 * N_VIEWS, tf), lambda i, j: (0, j)),
    ]
    args = [h, stats]
    if affine:
        in_specs += [pl.BlockSpec((1, tf), lambda i, j: (0, j)),
                     pl.BlockSpec((1, tf), lambda i, j: (0, j))]
        args += [gamma, beta]

    return pl.pallas_call(
        _make_norm_kernel(n_per_view, tm, affine, relu, view_scales),
        out_shape=jax.ShapeDtypeStruct((m, fdim), out_dtype),
        grid_spec=pltpu.PrefetchScalarGridSpec(
            num_scalar_prefetch=0,
            grid=grid,
            in_specs=in_specs,
            out_specs=pl.BlockSpec((tm, tf), lambda i, j: (i, j)),
        ),
        compiler_params=pltpu.CompilerParams(
            dimension_semantics=("parallel", "parallel"),
            vmem_limit_bytes=vmem_limit,
        ),
    )(*args)


# ---------------------------------------------------------------------------
# Stage 3: cross-correlation + Barlow Twins loss kernel
# ---------------------------------------------------------------------------
def _make_loss_kernel(lambd):
    def kernel(z1_ref, z2_ref, out_ref):
        i = pl.program_id(0)
        j = pl.program_id(1)

        @pl.when(j == 0)
        def _():
            out_ref[...] = jnp.zeros_like(out_ref)

        # c_tile = z1_hat[:, tile_i].T @ z2_hat[:, tile_j]; contract the batch
        # axis directly on the MXU (no explicit transpose pass).
        c = lax.dot_general(z1_ref[...], z2_ref[...],
                            dimension_numbers=(((0,), (0,)), ((), ())),
                            preferred_element_type=jnp.float32)

        # lane-dense (1, t) partial; sublane-only reduction each step
        out_ref[...] += lambd * jnp.sum(c * c, axis=0, keepdims=True)

        # Diagonal tiles add the on-diag correction:
        # loss = lambd*sum(c^2) + (1-lambd)*sum_diag(c^2) - 2*sum_diag(c) + D
        @pl.when(i == j)
        def _():
            r = lax.broadcasted_iota(jnp.int32, c.shape, 0)
            col = lax.broadcasted_iota(jnp.int32, c.shape, 1)
            d = jnp.where(r == col, c, 0.0)
            out_ref[...] += ((1.0 - lambd) * jnp.sum(d * d, axis=0, keepdims=True)
                             - 2.0 * jnp.sum(d, axis=0, keepdims=True))

    return kernel


def _corr_loss(z1h, z2h, *, lambd, loss_tile, vmem_limit):
    n, d = z1h.shape
    t = min(loss_tile, d)   # square tiles so diag tiles are exactly i == j
    assert d % t == 0
    gi = d // t

    partials = pl.pallas_call(
        _make_loss_kernel(float(lambd)),
        out_shape=jax.ShapeDtypeStruct((gi, 1, t), jnp.float32),
        grid_spec=pltpu.PrefetchScalarGridSpec(
            num_scalar_prefetch=0,
            grid=(gi, gi),
            in_specs=[pl.BlockSpec((n, t), lambda i, j: (0, i)),
                      pl.BlockSpec((n, t), lambda i, j: (0, j))],
            # per-i lane-dense partials -> i axis can be megacore-parallel
            out_specs=pl.BlockSpec((None, 1, t), lambda i, j: (i, 0, 0)),
        ),
        compiler_params=pltpu.CompilerParams(
            dimension_semantics=("parallel", "arbitrary"),
            vmem_limit_bytes=vmem_limit,
        ),
    )(z1h, z2h)
    # single tiny cross-lane reduce + the constant +D term of sum_i (c_ii-1)^2
    return jnp.sum(partials) + float(d)


# ---------------------------------------------------------------------------
# End-to-end forward
# ---------------------------------------------------------------------------
def barlow_twins_loss(y1, y2, params, *, batch_size, lambd=0.0051,
                      compute_dtype=jnp.bfloat16, tile_m=None, tile_k=None,
                      tile_f=None, loss_tile=None):
    """Forward pass: backbone stand-in + projector + BN + cross-corr loss.

    `params` should already be in the compute dtype (see prepare_params) so
    no per-step weight casts happen in the forward.
    """
    cfg = _pick_config()
    tile_m = tile_m or cfg["tile_m"]
    tile_k = tile_k or cfg["tile_k"]
    tile_f = tile_f or cfg["tile_f"]
    loss_tile = loss_tile or cfg["loss_tile"]

    n = y1.shape[0]
    wb, w1, g1, b1, w2, g2, b2, w3 = params
    cd = compute_dtype

    # Stack both views: each weight matrix streams once per (i) row sweep and
    # matmuls run with M = 2N rows (BN stats still strictly per view).
    x = jnp.concatenate([y1.reshape(n, -1), y2.reshape(n, -1)],
                        axis=0).astype(cd)

    mm = functools.partial(_linear, n_per_view=n, tile_m=tile_m, tile_k=tile_k,
                           tile_f=tile_f, w_buffers=cfg["w_buffers"],
                           vmem_limit=cfg["vmem_limit"], out_dtype=cd)
    bn = functools.partial(_bn_relu, n_per_view=n, tile_m=tile_m,
                           tile_f=tile_f, vmem_limit=cfg["vmem_limit"],
                           out_dtype=cd)

    # TODO(synk): the real ResNet-50 backbone (pretrained pickle weights) is
    # not reproducible here; a single linear feature extractor stands in.
    f = mm(x, wb, with_stats=False)

    # projector: Linear(no bias) -> BatchNorm1d -> ReLU  (x2)
    h, st = mm(f, w1, with_stats=True)
    h = bn(h, st, g1, b1, relu=True, view_scales=None)

    h, st = mm(h, w2, with_stats=True)
    h = bn(h, st, g2, b2, relu=True, view_scales=None)

    # final Linear(no bias) + affine-free BatchNorm1d; 1/batch_size folded
    # into the z1 (first-view) normalization scale.
    z, st = mm(h, w3, with_stats=True)
    z = bn(z, st, None, None, relu=False,
           view_scales=(1.0 / float(batch_size), 1.0))

    z1h, z2h = z[:n], z[n:]
    return _corr_loss(z1h, z2h, lambd=float(lambd),
                      loss_tile=loss_tile, vmem_limit=cfg["vmem_limit"])


# ---------------------------------------------------------------------------
# Pure-JAX reference (PyTorch semantics) for correctness checking
# ---------------------------------------------------------------------------
def _batchnorm_ref(h, gamma=None, beta=None):
    mean = jnp.mean(h, axis=0, keepdims=True)
    var = jnp.mean((h - mean) ** 2, axis=0, keepdims=True)
    hn = (h - mean) * lax.rsqrt(var + EPS)
    if gamma is not None:
        hn = hn * gamma + beta
    return hn


def barlow_twins_loss_ref(y1, y2, params, *, batch_size, lambd=0.0051):
    n = y1.shape[0]
    wb, w1, g1, b1, w2, g2, b2, w3 = params

    def embed(y):
        x = y.reshape(n, -1).astype(jnp.float32)
        f = x @ wb
        h = jnp.maximum(_batchnorm_ref(f @ w1, g1, b1), 0.0)
        h = jnp.maximum(_batchnorm_ref(h @ w2, g2, b2), 0.0)
        return _batchnorm_ref(h @ w3)

    z1, z2 = embed(y1), embed(y2)
    c = (z1.T @ z2) / batch_size
    d = c.shape[0]
    eye = jnp.eye(d, dtype=bool)
    on_diag = jnp.sum(jnp.where(eye, (c - 1.0) ** 2, 0.0))
    off_diag = jnp.sum(jnp.where(eye, 0.0, c ** 2))
    return on_diag + lambd * off_diag


def init_params(key, flat_dim, sizes):
    """Deterministic init. sizes ~ [backbone_feat, proj0, proj1, proj_out]."""
    keys = jax.random.split(key, 4)
    scale = lambda fan_in: 1.0 / jnp.sqrt(jnp.float32(fan_in))
    wb = jax.random.normal(keys[0], (flat_dim, sizes[0]), jnp.float32) * scale(flat_dim)
    w1 = jax.random.normal(keys[1], (sizes[0], sizes[1]), jnp.float32) * scale(sizes[0])
    g1 = jnp.ones((1, sizes[1]), jnp.float32)
    b1 = jnp.zeros((1, sizes[1]), jnp.float32)
    w2 = jax.random.normal(keys[2], (sizes[1], sizes[2]), jnp.float32) * scale(sizes[1])
    g2 = jnp.ones((1, sizes[2]), jnp.float32)
    b2 = jnp.zeros((1, sizes[2]), jnp.float32)
    w3 = jax.random.normal(keys[3], (sizes[2], sizes[3]), jnp.float32) * scale(sizes[2])
    return (wb, w1, g1, b1, w2, g2, b2, w3)


if __name__ == "__main__":
    # Small synthetic shapes: batch=16 per view, channels=4, spatial=16x16.
    N, C, H, W = 16, 4, 16, 16
    # Scaled-down, lane-aligned stand-in for sizes = [8192, 8192, 8192, 8192]:
    sizes = [256, 256, 256, 256]
    lambd = 0.0051

    key = jax.random.PRNGKey(0)
    k_y1, k_y2, k_w = jax.random.split(key, 3)
    y1 = jax.random.normal(k_y1, (N, C, H, W), jnp.float32)
    y2 = jax.random.normal(k_y2, (N, C, H, W), jnp.float32)
    params = init_params(k_w, C * H * W, sizes)

    ref = barlow_twins_loss_ref(y1, y2, params, batch_size=N, lambd=lambd)

    # Small explicit tiles so the demo exercises the M, feature and K grid
    # axes plus the 2x2 loss grid; production sizes use _pick_config defaults.
    demo_tiles = dict(tile_m=16, tile_k=512, tile_f=128, loss_tile=128)

    # 1) f32 run: tight check against the PyTorch-semantics reference.
    p32 = prepare_params(params, jnp.float32)
    loss32 = barlow_twins_loss(y1, y2, p32, batch_size=N, lambd=lambd,
                               compute_dtype=jnp.float32, **demo_tiles)
    loss32 = jax.block_until_ready(loss32)
    assert jnp.allclose(loss32, ref, rtol=1e-3, atol=1e-3), (loss32, ref)

    # 2) bf16 run (default / production streaming dtype): looser tolerance.
    pbf = prepare_params(params, jnp.bfloat16)
    lossbf = barlow_twins_loss(y1, y2, pbf, batch_size=N, lambd=lambd,
                               compute_dtype=jnp.bfloat16, **demo_tiles)
    lossbf = jax.block_until_ready(lossbf)
    assert jnp.allclose(lossbf, ref, rtol=1e-1, atol=1.0), (lossbf, ref)

    print("KERNEL_OK")
</pallas_src>

<mosaic_0001>
module attributes {stable_mosaic.version = 11 : i64} {
  func.func @kernel(%arg0: i32, %arg1: i32, %arg2: i32, %arg3: memref<16x512xf32, #tpu.memory_space<vmem>>, %arg4: memref<512x128xf32, #tpu.memory_space<vmem>>, %arg5: memref<16x128xf32, #tpu.memory_space<vmem>>, %arg6: memref<16x128xf32, #tpu.memory_space<vmem>>) attributes {dimension_semantics = [#tpu.dimension_semantics<parallel>, #tpu.dimension_semantics<parallel>, #tpu.dimension_semantics<arbitrary>], iteration_bounds = array<i64: 2, 2, 2>, scalar_prefetch = 0 : i64, scratch_operands = 1 : i64, tpu.core_type = #tpu.core_type<tc>, window_params = [{transform_indices = @transform_0, window_bounds = array<i64: 16, 512>}, {transform_indices = @transform_1, window_bounds = array<i64: 512, 128>}, {transform_indices = @transform_2, window_bounds = array<i64: 16, 128>}]} {
    %c1_i32 = arith.constant 1 : i32
    %0 = arith.cmpi eq, %arg2, %c1_i32 : i32
    %c0 = arith.constant 0 : index
    %c0_0 = arith.constant 0 : index
    %1 = vector.load %arg3[%c0, %c0_0] : memref<16x512xf32, #tpu.memory_space<vmem>>, vector<16x512xf32>
    %c0_1 = arith.constant 0 : index
    %c0_2 = arith.constant 0 : index
    %2 = vector.load %arg4[%c0_1, %c0_2] : memref<512x128xf32, #tpu.memory_space<vmem>>, vector<512x128xf32>
    %cst = arith.constant dense<0.000000e+00> : vector<16x128xf32>
    %3 = tpu.matmul %1, %2, %cst {dimension_numbers = #tpu.dot_dimension_numbers<[1], [0], [0], [1], [0, 0, 1, 1], [], []>} : vector<16x512xf32>, vector<512x128xf32>, vector<16x128xf32> -> vector<16x128xf32>
    %c0_i32 = arith.constant 0 : i32
    %4 = arith.cmpi eq, %arg2, %c0_i32 : i32
    %5 = arith.extui %4 : i1 to i32
    %c0_i32_3 = arith.constant 0 : i32
    %6 = arith.cmpi ne, %5, %c0_i32_3 : i32
    scf.if %6 {
      %c0_7 = arith.constant 0 : index
      %c0_8 = arith.constant 0 : index
      %12 = vector.load %arg6[%c0_7, %c0_8] : memref<16x128xf32, #tpu.memory_space<vmem>>, vector<16x128xf32>
      tpu.vector_store %arg6[%c0_7, %c0_8], %3 {strides = array<i32>} : memref<16x128xf32, #tpu.memory_space<vmem>>, vector<16x128xf32>,
    } else {
    }
    %c0_i32_4 = arith.constant 0 : i32
    %7 = arith.cmpi ne, %arg2, %c0_i32_4 : i32
    %8 = arith.extui %7 : i1 to i32
    %c0_i32_5 = arith.constant 0 : i32
    %9 = arith.cmpi ne, %8, %c0_i32_5 : i32
    scf.if %9 {
      %c0_7 = arith.constant 0 : index
      %c0_8 = arith.constant 0 : index
      %12 = vector.load %arg6[%c0_7, %c0_8] : memref<16x128xf32, #tpu.memory_space<vmem>>, vector<16x128xf32>
      %13 = arith.addf %12, %3 : vector<16x128xf32>
      %c0_9 = arith.constant 0 : index
      %c0_10 = arith.constant 0 : index
      %14 = vector.load %arg6[%c0_9, %c0_10] : memref<16x128xf32, #tpu.memory_space<vmem>>, vector<16x128xf32>
      tpu.vector_store %arg6[%c0_9, %c0_10], %13 {strides = array<i32>} : memref<16x128xf32, #tpu.memory_space<vmem>>, vector<16x128xf32>,
    } else {
    }
    %10 = arith.extui %0 : i1 to i32
    %c0_i32_6 = arith.constant 0 : i32
    %11 = arith.cmpi ne, %10, %c0_i32_6 : i32
    scf.if %11 {
      %c0_7 = arith.constant 0 : index
      %c0_8 = arith.constant 0 : index
      %12 = vector.load %arg6[%c0_7, %c0_8] : memref<16x128xf32, #tpu.memory_space<vmem>>, vector<16x128xf32>
      %c0_9 = arith.constant 0 : index
      %c0_10 = arith.constant 0 : index
      %13 = vector.load %arg5[%c0_9, %c0_10] : memref<16x128xf32, #tpu.memory_space<vmem>>, vector<16x128xf32>
      tpu.vector_store %arg5[%c0_9, %c0_10], %12 {strides = array<i32>} : memref<16x128xf32, #tpu.memory_space<vmem>>, vector<16x128xf32>,
    } else {
    }
    return
  }
  func.func @transform_0(%arg0: i32, %arg1: i32, %arg2: i32) -> (i32, i32) {
    %c0_i32 = arith.constant 0 : i32
    return %arg1, %arg2 : i32, i32
  }
  func.func @transform_1(%arg0: i32, %arg1: i32, %arg2: i32) -> (i32, i32) {
    %c0_i32 = arith.constant 0 : i32
    return %arg2, %arg0 : i32, i32
  }
  func.func @transform_2(%arg0: i32, %arg1: i32, %arg2: i32) -> (i32, i32) {
    %c0_i32 = arith.constant 0 : i32
    return %arg1, %arg0 : i32, i32
  }
}

</mosaic_0001>

<llo_original>
// kernel: tpu_custom_call.1
$region0: #{tpu_custom_call.1}
  #allocation0 [shape = 'u32[]', space=smem, size = 0x4, offset = 0x4, fixed_abs, tag = 'smem constant byte address 0x4 - core index']
  #allocation1 [shape = 'u32[144,128]{1,0:T(1,128)}', space=vmem, size = 0x12000, scoped, tag = 'internal scratch']
  #allocation2 [shape = 'f32[16,128]{1,0:T(8,128)}', space=vmem, size = 0x2000, scoped, tag = 'scratch operand']
  %s0 = inlined_call_operand.hbm [shape: f32[32,1024], index: 0, kind: input, shape index: {}]
  %s1 = inlined_call_operand.hbm [shape: f32[1024,256], index: 1, kind: input, shape index: {}]
  %s2 = inlined_call_operand.hbm [shape: f32[32,256], index: 2, kind: output, shape index: {}]
  %s3 = sld [smem:[#allocation0]]
  $region61: #{tpu_custom_call.1} parent=0
    _
  %s5 = ssub.s32 1, %s3
  %s6 = scalar_select 0, %s5, %s3
  $region1: #{tpu_custom_call.1} parent=0
    #allocation3 [shape = 'u8[65536]{0}', space=vmem, size = 0x10000, scoped, tag = 'input window, operand 0']
    #allocation4 [shape = 's32[2]{0}', space=sflag, size = 0x8, scoped, tag = 'scoped memory for tpu_custom_call.1']
    #allocation5 [shape = 's32[2]{0}', space=sflag, size = 0x8, scoped, tag = 'scoped memory for tpu_custom_call.1']
    #allocation6 [shape = 'u8[524288]{0}', space=vmem, size = 0x80000, scoped, tag = 'input window, operand 1']
    #allocation7 [shape = 's32[2]{0}', space=sflag, size = 0x8, scoped, tag = 'scoped memory for tpu_custom_call.1']
    #allocation8 [shape = 'u8[16384]{0}', space=vmem, size = 0x4000, scoped, tag = 'output window, operand 0']
    %7 = vsyncpa [#allocation4], 0
    %s8 = scalar_lea.sflag [#allocation4], 1
    %9 = vsyncpa %s8, 0
    %10 = vsyncpa [#allocation7], 0
    %s11 = scalar_lea.sflag [#allocation7], 1
    %12 = vsyncpa %s11, 0
    %13 = vsyncpa [#allocation5], 0
    %s14 = scalar_lea.sflag [#allocation5], 1
    %15 = vsyncpa %s14, 0
    loop: start=0, step=1, limit=10
    $region2: #{tpu_custom_call.1} parent=1 // loop_pre_header
      _
    $region3: #{tpu_custom_call.1} parent=1 // loop_header
      %s17 = sphi 0, %s21
      %p18 = scmp.ge.s32.totalorder %s17, 10
      %s24 = sphi 0, %s43
      %s25 = sphi 0, %s39
      %s26 = sphi 0, %s35
      %s27 = sphi 0, %s24
      %s28 = sphi 0, %s25
      %s29 = sphi 0, %s26
      %s30 = sphi 0, %s27
      %s31 = sphi 0, %s28
      %s32 = sphi 0, %s29
      %s48 = sphi 0, %s50
      %s51 = sphi 0, %s48
      %s52 = sphi 0, %s51
      %s68 = sphi 0, %s52
      %s76 = sphi 0, %s78
      %s79 = sphi 0, %s76
      %s80 = sphi 0, %s79
      %s96 = sphi 0, %s80
      %s104 = sphi 0, %s106
      %s107 = sphi 0, %s104
      %s108 = sphi 0, %s107
      %s124 = sphi 0, %s108
    $region4: #{tpu_custom_call.1} parent=1 // loop_header_branch
      %20 = sbr.rel (%p18) target = $region8
    $region5: #{tpu_custom_call.1} parent=1 // loop_body
      %s22 = ssub.s32 %s17, 1
      %s23 = ssub.s32 %s17, 2
      %s33 = sadd.s32 1, %s26
      %p34 = scmp.ge.s32.totalorder %s33, 2
      %s35 = scalar_select %p34, 0, %s33
      %s36 = sadd.s32 1, %s25
      %s37 = scalar_select %p34, %s36, %s25
      %p38 = scmp.ge.s32.totalorder %s37, 2
      %s39 = scalar_select %p38, 0, %s37
      %s40 = sadd.s32 1, %s24
      %s41 = scalar_select %p38, %s40, %s24
      %p42 = scmp.ge.s32.totalorder %s41, 2
      %s43 = scalar_select %p42, 0, %s41
      %s44 = ssub.s32 %s25, %s39
      %s45 = ssub.s32 %s26, %s35
      %s46 = sor.u32 %s44, %s45
      %p47 = scmp.eq.s32.totalorder %s46, 0
      %s49 = sadd.s32 %s48, 1
      %s50 = scalar_select %p47, %s48, %s49
      %p53 = pneg %p47
      %p54 = scmp.eq.s32.totalorder %s17, 7
      %p55 = por %p53, %p54
      %p56 = scmp.ne.s32.totalorder %s48, %s51
      %p57 = scmp.eq.s32.totalorder %s17, 0
      %p58 = por %p56, %p57
      %p59 = scmp.ne.s32.totalorder %s48, %s51
      %p60 = scmp.eq.s32.totalorder %s22, 7
      %p61 = por %p59, %p60
      %p62 = scmp.ne.s32.totalorder %s51, %s52
      %p63 = scmp.eq.s32.totalorder %s22, 0
      %p64 = por %p62, %p63
      %p65 = scmp.ne.s32.totalorder %s51, %s52
      %p66 = scmp.eq.s32.totalorder %s23, 7
      %p67 = por %p65, %p66
      %p69 = scmp.ne.s32.totalorder %s52, %s68
      %p70 = scmp.eq.s32.totalorder %s23, 0
      %p71 = por %p69, %p70
      %s72 = ssub.s32 %s26, %s35
      %s73 = ssub.s32 %s24, %s43
      %s74 = sor.u32 %s72, %s73
      %p75 = scmp.eq.s32.totalorder %s74, 0
      %s77 = sadd.s32 %s76, 1
      %s78 = scalar_select %p75, %s76, %s77
      %p81 = pneg %p75
      %p82 = scmp.eq.s32.totalorder %s17, 7
      %p83 = por %p81, %p82
      %p84 = scmp.ne.s32.totalorder %s76, %s79
      %p85 = scmp.eq.s32.totalorder %s17, 0
      %p86 = por %p84, %p85
      %p87 = scmp.ne.s32.totalorder %s76, %s79
      %p88 = scmp.eq.s32.totalorder %s22, 7
      %p89 = por %p87, %p88
      %p90 = scmp.ne.s32.totalorder %s79, %s80
      %p91 = scmp.eq.s32.totalorder %s22, 0
      %p92 = por %p90, %p91
      %p93 = scmp.ne.s32.totalorder %s79, %s80
      %p94 = scmp.eq.s32.totalorder %s23, 7
      %p95 = por %p93, %p94
      %p97 = scmp.ne.s32.totalorder %s80, %s96
      %p98 = scmp.eq.s32.totalorder %s23, 0
      %p99 = por %p97, %p98
      %s100 = ssub.s32 %s25, %s39
      %s101 = ssub.s32 %s24, %s43
      %s102 = sor.u32 %s100, %s101
      %p103 = scmp.eq.s32.totalorder %s102, 0
      %s105 = sadd.s32 %s104, 1
      %s106 = scalar_select %p103, %s104, %s105
      %p109 = pneg %p103
      %p110 = scmp.eq.s32.totalorder %s17, 7
      %p111 = por %p109, %p110
      %p112 = scmp.ne.s32.totalorder %s104, %s107
      %p113 = scmp.eq.s32.totalorder %s17, 0
      %p114 = por %p112, %p113
      %p115 = scmp.ne.s32.totalorder %s104, %s107
      %p116 = scmp.eq.s32.totalorder %s22, 7
      %p117 = por %p115, %p116
      %p118 = scmp.ne.s32.totalorder %s107, %s108
      %p119 = scmp.eq.s32.totalorder %s22, 0
      %p120 = por %p118, %p119
      %p121 = scmp.ne.s32.totalorder %s107, %s108
      %p122 = scmp.eq.s32.totalorder %s23, 7
      %p123 = por %p121, %p122
      %p125 = scmp.ne.s32.totalorder %s108, %s124
      %p126 = scmp.eq.s32.totalorder %s23, 0
      %p127 = por %p125, %p126
      %p128 = scmp.le.s32.totalorder 1, %s17
      %p129 = scmp.lt.s32.totalorder %s17, 9
      %p130 = pnand %p128, %p129
      %p131 = pneg %p130
      // Predicated region
      $region9: #{tpu_custom_call.1} parent=5 // pred_check
        _
      $region10: #{tpu_custom_call.1} parent=5 // pred_check_branch
        %133 = sbr.rel (%p130) target = $region12
      $region11: #{tpu_custom_call.1} parent=5 // pred_region
        %s134 = ssub.s32 %s17, 1
      $region12: #{tpu_custom_call.1} parent=5 // pred_fallthru
        _
      %p135 = scmp.lt.s32.totalorder %s17, 8
      // Predicated region
      $region13: #{tpu_custom_call.1} parent=5 // pred_check
        %p136 = pneg %p135
      $region14: #{tpu_custom_call.1} parent=5 // pred_check_branch
        %138 = sbr.rel (%p136) target = $region16
      $region15: #{tpu_custom_call.1} parent=5 // pred_region
        // Predicated region
        $region17: #{tpu_custom_call.1} parent=15 // pred_check
          %p139 = pneg %p58
        $region18: #{tpu_custom_call.1} parent=15 // pred_check_branch
          %141 = sbr.rel (%p139) target = $region20
        $region19: #{tpu_custom_call.1} parent=15 // pred_region
          %s142 = sand.u32 %s48, 1
          %s143 = scalar_lea.sflag [#allocation4], %s142
          %s144 = sand.u32 %s48, 1
          %s145 = smul.addr %s144, 64
          %s146 = scalar_lea.vmem [#allocation3], %s145
          %s147 = smul.u32 2, %s25
          %s148 = smul.u32 4, %s26
          %s150 = ssub.s32 1024, 1024
          %151 = vsyncadd %s143, %s150
          %s152 = smul.addr %s147, 8
          %s153 = sadd.s32 %s148, %s152
          %s154 = smul.addr %s153, 128
          %s155 = scalar_lea.hbm %s0, %s154
          %s156 = sshll.u32 %s146, 4
          %s157 = int_to_ptr.vmem [resolvable:$true] %s156
          %162 = dma.hbm_to_vmem [thread:$0]  %s155, 1024, %s157, %s143, 1024, 512, 32
        $region20: #{tpu_custom_call.1} parent=15 // pred_fallthru
          _
        // Predicated region
        $region21: #{tpu_custom_call.1} parent=15 // pred_check
          %p163 = pneg %p86
        $region22: #{tpu_custom_call.1} parent=15 // pred_check_branch
          %165 = sbr.rel (%p163) target = $region24
        $region23: #{tpu_custom_call.1} parent=15 // pred_region
          %s166 = sand.u32 %s76, 1
          %s167 = scalar_lea.sflag [#allocation7], %s166
          %s168 = sand.u32 %s76, 1
          %s169 = smul.addr %s168, 512
          %s170 = scalar_lea.vmem [#allocation6], %s169
          %s171 = smul.u32 64, %s26
          %s173 = ssub.s32 8192, 8192
          %174 = vsyncadd %s167, %s173
          %s175 = smul.addr %s171, 2
          %s176 = sadd.s32 %s24, %s175
          %s177 = smul.addr %s176, 128
          %s178 = scalar_lea.hbm %s1, %s177
          %s179 = sshll.u32 %s170, 4
          %s180 = int_to_ptr.vmem [resolvable:$true] %s179
          %185 = dma.hbm_to_vmem [thread:$0]  %s178, 8192, %s180, %s167, 256, 128, 8
        $region24: #{tpu_custom_call.1} parent=15 // pred_fallthru
          _
      $region16: #{tpu_custom_call.1} parent=5 // pred_fallthru
        _
      %p186 = scmp.le.s32.totalorder 1, %s17
      %p187 = scmp.lt.s32.totalorder %s17, 9
      %p188 = pnand %p186, %p187
      %p189 = pneg %p188
      // Predicated region
      $region25: #{tpu_custom_call.1} parent=5 // pred_check
        _
      $region26: #{tpu_custom_call.1} parent=5 // pred_check_branch
        %191 = sbr.rel (%p188) target = $region28
      $region27: #{tpu_custom_call.1} parent=5 // pred_region
        %s192 = ssub.s32 %s17, 1
        %s193 = sand.u32 %s51, 1
        %s194 = scalar_lea.sflag [#allocation4], %s193
        %s195 = sand.u32 %s51, 1
        %s196 = smul.addr %s195, 64
        %s197 = scalar_lea.vmem [#allocation3], %s196
        // Predicated region
        $region29: #{tpu_custom_call.1} parent=27 // pred_check
          %p198 = pneg %p64
        $region30: #{tpu_custom_call.1} parent=27 // pred_check_branch
          %200 = sbr.rel (%p198) target = $region32
        $region31: #{tpu_custom_call.1} parent=27 // pred_region
          %201 = dma.done %s194, 1024
        $region32: #{tpu_custom_call.1} parent=27 // pred_fallthru
          _
        %s202 = sand.u32 %s79, 1
        %s203 = scalar_lea.sflag [#allocation7], %s202
        %s204 = sand.u32 %s79, 1
        %s205 = smul.addr %s204, 512
        %s206 = scalar_lea.vmem [#allocation6], %s205
        // Predicated region
        $region33: #{tpu_custom_call.1} parent=27 // pred_check
          %p207 = pneg %p92
        $region34: #{tpu_custom_call.1} parent=27 // pred_check_branch
          %209 = sbr.rel (%p207) target = $region36
        $region35: #{tpu_custom_call.1} parent=27 // pred_region
          %210 = dma.done %s203, 8192
        $region36: #{tpu_custom_call.1} parent=27 // pred_fallthru
          _
        %s211 = sand.u32 %s51, 1
        %s212 = scalar_lea.sflag [#allocation4], %s211
        %s213 = sand.u32 %s51, 1
        %s214 = smul.addr %s213, 64
        %s215 = scalar_lea.vmem [#allocation3], %s214
        %p216 = pneg %p64
        %p217 = pneg %p61
        %s218 = sand.u32 %s79, 1
        %s219 = scalar_lea.sflag [#allocation7], %s218
        %s220 = sand.u32 %s79, 1
        %s221 = smul.addr %s220, 512
        %s222 = scalar_lea.vmem [#allocation6], %s221
        %p223 = pneg %p92
        %p224 = pneg %p89
        %p225 = pneg %p120
        %p226 = pneg %p117
        %s227 = sand.u32 %s107, 1
        %s228 = scalar_lea.sflag [#allocation5], %s227
        %s229 = sand.u32 %s107, 1
        %s230 = smul.addr %s229, 16
        %s231 = scalar_lea.vmem [#allocation8], %s230
        %s232 = smul.u32 2, %s28
        %s233 = smul.u32 4, %s29
        %s234 = smul.u32 64, %s29
        %s235 = smul.u32 2, %s28
        %p236 = scmp.eq.s32.totalorder %s29, 1
        %v237 = vld [vmem:[%s197] sm:$0xff]
        %v238 = vld [vmem:[%s197 + $0x8] sm:$0xff]
        %v239 = vld [vmem:[%s197 + $0x10] sm:$0xff]
        %v240 = vld [vmem:[%s197 + $0x18] sm:$0xff]
        %v241 = vld [vmem:[%s197 + $0x20] sm:$0xff]
        %v242 = vld [vmem:[%s197 + $0x28] sm:$0xff]
        %v243 = vld [vmem:[%s197 + $0x30] sm:$0xff]
        %v244 = vld [vmem:[%s197 + $0x38] sm:$0xff]
        %v245 = vld [vmem:[%s206] sm:$0xff]
        %v246 = vld [vmem:[%s206 + $0x8] sm:$0xff]
        %v247 = vld [vmem:[%s206 + $0x10] sm:$0xff]
        %v248 = vld [vmem:[%s206 + $0x18] sm:$0xff]
        %v249 = vld [vmem:[%s206 + $0x20] sm:$0xff]
        %v250 = vld [vmem:[%s206 + $0x28] sm:$0xff]
        %v251 = vld [vmem:[%s206 + $0x30] sm:$0xff]
        %v252 = vld [vmem:[%s206 + $0x38] sm:$0xff]
        %v253 = vld [vmem:[%s206 + $0x40] sm:$0xff]
        %v254 = vld [vmem:[%s206 + $0x48] sm:$0xff]
        %v255 = vld [vmem:[%s206 + $0x50] sm:$0xff]
        %v256 = vld [vmem:[%s206 + $0x58] sm:$0xff]
        %v257 = vld [vmem:[%s206 + $0x60] sm:$0xff]
        %v258 = vld [vmem:[%s206 + $0x68] sm:$0xff]
        %v259 = vld [vmem:[%s206 + $0x70] sm:$0xff]
        %v260 = vld [vmem:[%s206 + $0x78] sm:$0xff]
        %v261 = vld [vmem:[%s206 + $0x80] sm:$0xff]
        %v262 = vld [vmem:[%s206 + $0x88] sm:$0xff]
        %v263 = vld [vmem:[%s206 + $0x90] sm:$0xff]
        %v264 = vld [vmem:[%s206 + $0x98] sm:$0xff]
        %v265 = vld [vmem:[%s206 + $0xa0] sm:$0xff]
        %v266 = vld [vmem:[%s206 + $0xa8] sm:$0xff]
        %v267 = vld [vmem:[%s206 + $0xb0] sm:$0xff]
        %v268 = vld [vmem:[%s206 + $0xb8] sm:$0xff]
        %v269 = vld [vmem:[%s206 + $0xc0] sm:$0xff]
        %v270 = vld [vmem:[%s206 + $0xc8] sm:$0xff]
        %v271 = vld [vmem:[%s206 + $0xd0] sm:$0xff]
        %v272 = vld [vmem:[%s206 + $0xd8] sm:$0xff]
        %v273 = vld [vmem:[%s206 + $0xe0] sm:$0xff]
        %v274 = vld [vmem:[%s206 + $0xe8] sm:$0xff]
        %v275 = vld [vmem:[%s206 + $0xf0] sm:$0xff]
        %v276 = vld [vmem:[%s206 + $0xf8] sm:$0xff]
        %v277 = vld [vmem:[%s206 + $0x100] sm:$0xff]
        %v278 = vld [vmem:[%s206 + $0x108] sm:$0xff]
        %v279 = vld [vmem:[%s206 + $0x110] sm:$0xff]
        %v280 = vld [vmem:[%s206 + $0x118] sm:$0xff]
        %v281 = vld [vmem:[%s206 + $0x120] sm:$0xff]
        %v282 = vld [vmem:[%s206 + $0x128] sm:$0xff]
        %v283 = vld [vmem:[%s206 + $0x130] sm:$0xff]
        %v284 = vld [vmem:[%s206 + $0x138] sm:$0xff]
        %v285 = vld [vmem:[%s206 + $0x140] sm:$0xff]
        %v286 = vld [vmem:[%s206 + $0x148] sm:$0xff]
        %v287 = vld [vmem:[%s206 + $0x150] sm:$0xff]
        %v288 = vld [vmem:[%s206 + $0x158] sm:$0xff]
        %v289 = vld [vmem:[%s206 + $0x160] sm:$0xff]
        %v290 = vld [vmem:[%s206 + $0x168] sm:$0xff]
        %v291 = vld [vmem:[%s206 + $0x170] sm:$0xff]
        %v292 = vld [vmem:[%s206 + $0x178] sm:$0xff]
        %v293 = vld [vmem:[%s206 + $0x180] sm:$0xff]
        %v294 = vld [vmem:[%s206 + $0x188] sm:$0xff]
        %v295 = vld [vmem:[%s206 + $0x190] sm:$0xff]
        %v296 = vld [vmem:[%s206 + $0x198] sm:$0xff]
        %v297 = vld [vmem:[%s206 + $0x1a0] sm:$0xff]
        %v298 = vld [vmem:[%s206 + $0x1a8] sm:$0xff]
        %v299 = vld [vmem:[%s206 + $0x1b0] sm:$0xff]
        %v300 = vld [vmem:[%s206 + $0x1b8] sm:$0xff]
        %v301 = vld [vmem:[%s206 + $0x1c0] sm:$0xff]
        %v302 = vld [vmem:[%s206 + $0x1c8] sm:$0xff]
        %v303 = vld [vmem:[%s206 + $0x1d0] sm:$0xff]
        %v304 = vld [vmem:[%s206 + $0x1d8] sm:$0xff]
        %v305 = vld [vmem:[%s206 + $0x1e0] sm:$0xff]
        %v306 = vld [vmem:[%s206 + $0x1e8] sm:$0xff]
        %v307 = vld [vmem:[%s206 + $0x1f0] sm:$0xff]
        %v308 = vld [vmem:[%s206 + $0x1f8] sm:$0xff]
        %309 = vmatprep.subr.mxu0 0.0
        %310 = vmatpush1.msra.mxu0 %v245
        %311 = vmatprep.subr.mxu0 0.0
        %312 = vmatpush1.msra.mxu0 %v246
        %313 = vmatprep.subr.mxu0 0.0
        %314 = vmatpush1.msra.mxu0 %v247
        %315 = vmatprep.subr.mxu0 0.0
        %316 = vmatpush1.msra.mxu0 %v248
        %317 = vmatprep.subr.mxu0 0.0
        %318 = vmatpush1.msra.mxu0 %v249
        %319 = vmatprep.subr.mxu0 0.0
        %320 = vmatpush1.msra.mxu0 %v250
        %321 = vmatprep.subr.mxu0 0.0
        %322 = vmatpush1.msra.mxu0 %v251
        %323 = vmatprep.subr.mxu0 0.0
        %324 = vmatpush1.msra.mxu0 %v252
        %325 = vmatprep.subr.mxu0 0.0
        %326 = vmatpush1.msra.mxu0 %v253
        %327 = vmatprep.subr.mxu0 0.0
        %328 = vmatpush1.msra.mxu0 %v254
        %329 = vmatprep.subr.mxu0 0.0
        %330 = vmatpush1.msra.mxu0 %v255
        %331 = vmatprep.subr.mxu0 0.0
        %332 = vmatpush1.msra.mxu0 %v256
        %333 = vmatprep.subr.mxu0 0.0
        %334 = vmatpush1.msra.mxu0 %v257
        %335 = vmatprep.subr.mxu0 0.0
        %336 = vmatpush1.msra.mxu0 %v258
        %337 = vmatprep.subr.mxu0 0.0
        %338 = vmatpush1.msra.mxu0 %v259
        %339 = vmatprep.subr.mxu0 0.0
        %340 = vmatpush1.msra.mxu0 %v260
        %341 = vmatprep.subr.mxu0 0.0
        %342 = vmatpush1.msra.mxu0 %v261
        %343 = vmatprep.subr.mxu0 0.0
        %344 = vmatpush1.msra.mxu0 %v262
        %345 = vmatprep.subr.mxu0 0.0
        %346 = vmatpush1.msra.mxu0 %v263
        %347 = vmatprep.subr.mxu0 0.0
        %348 = vmatpush1.msra.mxu0 %v264
        %349 = vmatprep.subr.mxu0 0.0
        %350 = vmatpush1.msra.mxu0 %v265
        %351 = vmatprep.subr.mxu0 0.0
        %352 = vmatpush1.msra.mxu0 %v266
        %353 = vmatprep.subr.mxu0 0.0
        %354 = vmatpush1.msra.mxu0 %v267
        %355 = vmatprep.subr.mxu0 0.0
        %356 = vmatpush1.msra.mxu0 %v268
        %357 = vmatprep.subr.mxu0 0.0
        %358 = vmatpush1.msra.mxu0 %v269
        %359 = vmatprep.subr.mxu0 0.0
        %360 = vmatpush1.msra.mxu0 %v270
        %361 = vmatprep.subr.mxu0 0.0
        %362 = vmatpush1.msra.mxu0 %v271
        %363 = vmatprep.subr.mxu0 0.0
        %364 = vmatpush1.msra.mxu0 %v272
        %365 = vmatprep.subr.mxu0 0.0
        %366 = vmatpush1.msra.mxu0 %v273
        %367 = vmatprep.subr.mxu0 0.0
        %368 = vmatpush1.msra.mxu0 %v274
        %369 = vmatprep.subr.mxu0 0.0
        %370 = vmatpush1.msra.mxu0 %v275
        %371 = vmatprep.subr.mxu0 0.0
        %372 = vmatpush1.msra.mxu0 %v276
        %373 = vmatprep.mubr.f32.mxu0 %v238
        %374 = vmatmul.mubr.f32.gmra.mrb[0].mxu0 %v237
        %v375 = vpop.f32.mrb[0].mxu0
        %v376 = vadd.f32 0.0, %v375
        %v377 = vpop.f32.mrb[0].mxu0
        %378 = vmatprep.mubr.f32.mxu0 %v242
        %379 = vmatmul.mubr.f32.gmra.mrb[0].mxu0 %v241
        %v380 = vpop.f32.mrb[0].mxu0
        %v381 = vadd.f32 0.0, %v380
        %v382 = vpop.f32.mrb[0].mxu0
        %383 = vdwg.mxu0
        %384 = vmatprep.subr.mxu0 0.0
        %385 = vmatpush1.msra.mxu0 %v277
        %386 = vmatprep.subr.mxu0 0.0
        %387 = vmatpush1.msra.mxu0 %v278
        %388 = vmatprep.subr.mxu0 0.0
        %389 = vmatpush1.msra.mxu0 %v279
        %390 = vmatprep.subr.mxu0 0.0
        %391 = vmatpush1.msra.mxu0 %v280
        %392 = vmatprep.subr.mxu0 0.0
        %393 = vmatpush1.msra.mxu0 %v281
        %394 = vmatprep.subr.mxu0 0.0
        %395 = vmatpush1.msra.mxu0 %v282
        %396 = vmatprep.subr.mxu0 0.0
        %397 = vmatpush1.msra.mxu0 %v283
        %398 = vmatprep.subr.mxu0 0.0
        %399 = vmatpush1.msra.mxu0 %v284
        %400 = vmatprep.subr.mxu0 0.0
        %401 = vmatpush1.msra.mxu0 %v285
        %402 = vmatprep.subr.mxu0 0.0
        %403 = vmatpush1.msra.mxu0 %v286
        %404 = vmatprep.subr.mxu0 0.0
        %405 = vmatpush1.msra.mxu0 %v287
        %406 = vmatprep.subr.mxu0 0.0
        %407 = vmatpush1.msra.mxu0 %v288
        %408 = vmatprep.subr.mxu0 0.0
        %409 = vmatpush1.msra.mxu0 %v289
        %410 = vmatprep.subr.mxu0 0.0
        %411 = vmatpush1.msra.mxu0 %v290
        %412 = vmatprep.subr.mxu0 0.0
        %413 = vmatpush1.msra.mxu0 %v291
        %414 = vmatprep.subr.mxu0 0.0
        %415 = vmatpush1.msra.mxu0 %v292
        %416 = vmatprep.subr.mxu0 0.0
        %417 = vmatpush1.msra.mxu0 %v293
        %418 = vmatprep.subr.mxu0 0.0
        %419 = vmatpush1.msra.mxu0 %v294
        %420 = vmatprep.subr.mxu0 0.0
        %421 = vmatpush1.msra.mxu0 %v295
        %422 = vmatprep.subr.mxu0 0.0
        %423 = vmatpush1.msra.mxu0 %v296
        %424 = vmatprep.subr.mxu0 0.0
        %425 = vmatpush1.msra.mxu0 %v297
        %426 = vmatprep.subr.mxu0 0.0
        %427 = vmatpush1.msra.mxu0 %v298
        %428 = vmatprep.subr.mxu0 0.0
        %429 = vmatpush1.msra.mxu0 %v299
        %430 = vmatprep.subr.mxu0 0.0
        %431 = vmatpush1.msra.mxu0 %v300
        %432 = vmatprep.subr.mxu0 0.0
        %433 = vmatpush1.msra.mxu0 %v301
        %434 = vmatprep.subr.mxu0 0.0
        %435 = vmatpush1.msra.mxu0 %v302
        %436 = vmatprep.subr.mxu0 0.0
        %437 = vmatpush1.msra.mxu0 %v303
        %438 = vmatprep.subr.mxu0 0.0
        %439 = vmatpush1.msra.mxu0 %v304
        %440 = vmatprep.subr.mxu0 0.0
        %441 = vmatpush1.msra.mxu0 %v305
        %442 = vmatprep.subr.mxu0 0.0
        %443 = vmatpush1.msra.mxu0 %v306
        %444 = vmatprep.subr.mxu0 0.0
        %445 = vmatpush1.msra.mxu0 %v307
        %446 = vmatprep.subr.mxu0 0.0
        %447 = vmatpush1.msra.mxu0 %v308
        %448 = vmatprep.mubr.f32.mxu0 %v240
        %449 = vmatmul.mubr.f32.gmra.mrb[0].mxu0 %v239
        %v450 = vpop.f32.mrb[0].mxu0
        %v451 = vadd.f32 %v376, %v450
        %v452 = vpop.f32.mrb[0].mxu0
        %453 = vmatprep.mubr.f32.mxu0 %v244
        %454 = vmatmul.mubr.f32.gmra.mrb[0].mxu0 %v243
        %v455 = vpop.f32.mrb[0].mxu0
        %v456 = vadd.f32 %v381, %v455
        %v457 = vpop.f32.mrb[0].mxu0
        %458 = vdwg.mxu0
        %p459 = scmp.eq.s32.totalorder %s29, 0
        // Predicated region
        $region37: #{tpu_custom_call.1} parent=27 // pred_check
          %p460 = pneg %p459
        $region38: #{tpu_custom_call.1} parent=27 // pred_check_branch
          %462 = sbr.rel (%p460) target = $region40
        $region39: #{tpu_custom_call.1} parent=27 // pred_region
          %463 = vst [vmem:[#allocation2] sm:$0xff] %v451
          %464 = vst [vmem:[#allocation2 + $0x8] sm:$0xff] %v456
        $region40: #{tpu_custom_call.1} parent=27 // pred_fallthru
          _
        %p465 = scmp.ne.s32.totalorder %s29, 0
        // Predicated region
        $region41: #{tpu_custom_call.1} parent=27 // pred_check
          %p466 = pneg %p465
        $region42: #{tpu_custom_call.1} parent=27 // pred_check_branch
          %468 = sbr.rel (%p466) target = $region44
        $region43: #{tpu_custom_call.1} parent=27 // pred_region
          %v469 = vld [vmem:[#allocation2] sm:$0xff]
          %v470 = vld [vmem:[#allocation2 + $0x8] sm:$0xff]
          %v471 = vadd.f32 %v469, %v451
          %v472 = vadd.f32 %v470, %v456
          %473 = vst [vmem:[#allocation2] sm:$0xff] %v471
          %474 = vst [vmem:[#allocation2 + $0x8] sm:$0xff] %v472
        $region44: #{tpu_custom_call.1} parent=27 // pred_fallthru
          _
        // Predicated region
        $region45: #{tpu_custom_call.1} parent=27 // pred_check
          %p475 = pneg %p236
        $region46: #{tpu_custom_call.1} parent=27 // pred_check_branch
          %477 = sbr.rel (%p475) target = $region48
        $region47: #{tpu_custom_call.1} parent=27 // pred_region
          %v478 = vld [vmem:[#allocation2] sm:$0xff]
          %v479 = vld [vmem:[#allocation2 + $0x8] sm:$0xff]
          %480 = vst [vmem:[%s231] sm:$0xff] %v478
          %481 = vst [vmem:[%s231 + $0x8] sm:$0xff] %v479
        $region48: #{tpu_custom_call.1} parent=27 // pred_fallthru
          _
        %s482 = sand.u32 %s107, 1
        %s483 = scalar_lea.sflag [#allocation5], %s482
        %s484 = sand.u32 %s107, 1
        %s485 = smul.addr %s484, 16
        %s486 = scalar_lea.vmem [#allocation8], %s485
        // Predicated region
        $region49: #{tpu_custom_call.1} parent=27 // pred_check
          %p487 = pneg %p117
        $region50: #{tpu_custom_call.1} parent=27 // pred_check_branch
          %489 = sbr.rel (%p487) target = $region52
        $region51: #{tpu_custom_call.1} parent=27 // pred_region
          %s490 = smul.u32 2, %s28
          %s492 = ssub.s32 256, 256
          %493 = vsyncadd %s483, %s492
          %s494 = smul.addr %s490, 2
          %s495 = sadd.s32 %s27, %s494
          %s496 = smul.addr %s495, 128
          %s497 = scalar_lea.hbm %s2, %s496
          %s498 = sshll.u32 %s486, 4
          %s499 = int_to_ptr.vmem [resolvable:$true] %s498
          %504 = dma.vmem_to_hbm [thread:$0]  %s499, 256, %s497, %s483, 128, 256, 8
        $region52: #{tpu_custom_call.1} parent=27 // pred_fallthru
          _
      $region28: #{tpu_custom_call.1} parent=5 // pred_fallthru
        _
      %p505 = scmp.le.s32.totalorder 2, %s17
      // Predicated region
      $region53: #{tpu_custom_call.1} parent=5 // pred_check
        %p506 = pneg %p505
      $region54: #{tpu_custom_call.1} parent=5 // pred_check_branch
        %508 = sbr.rel (%p506) target = $region56
      $region55: #{tpu_custom_call.1} parent=5 // pred_region
        %s509 = ssub.s32 %s17, 2
        // Predicated region
        $region57: #{tpu_custom_call.1} parent=55 // pred_check
          %p510 = pneg %p123
        $region58: #{tpu_custom_call.1} parent=55 // pred_check_branch
          %512 = sbr.rel (%p510) target = $region60
        $region59: #{tpu_custom_call.1} parent=55 // pred_region
          %s513 = sand.u32 %s108, 1
          %s514 = scalar_lea.sflag [#allocation5], %s513
          %s515 = sand.u32 %s108, 1
          %s516 = smul.addr %s515, 16
          %s517 = scalar_lea.vmem [#allocation8], %s516
          %518 = dma.done %s514, 256
        $region60: #{tpu_custom_call.1} parent=55 // pred_fallthru
          _
      $region56: #{tpu_custom_call.1} parent=5 // pred_fallthru
        _
    $region6: #{tpu_custom_call.1} parent=1 // loop_footer
      %s21 = sadd.s32 1, %s17
    $region7: #{tpu_custom_call.1} parent=1 // loop_footer_branch
      %16 = sbr.rel target = $region3
    $region8: #{tpu_custom_call.1} parent=1 // loop_exit
      _
    %519 = vsyncpa [#allocation4], 1
    %s520 = scalar_lea.sflag [#allocation4], 1
    %521 = vsyncpa %s520, 1
    %522 = vsyncpa [#allocation7], 1
    %s523 = scalar_lea.sflag [#allocation7], 1
    %524 = vsyncpa %s523, 1
    %525 = vsyncpa [#allocation5], 1
    %s526 = scalar_lea.sflag [#allocation5], 1
    %527 = vsyncpa %s526, 1

</llo_original>
